<compile_context>
chip_gen: v5e
topology: v5e:2x2
jax: 0.10.0
libtpu: 0.0.40
codegen_flags: <defaults>
</compile_context>

<pallas_src>
import functools

import jax
import jax.numpy as jnp
from jax import lax
from jax.experimental import pallas as pl
from jax.experimental.pallas import tpu as pltpu

BN_EPS = 1e-5
LANE = 128
ROW_TILE_QUANTUM = 16          # multiple of 8 sublanes; 16 keeps bf16 tiles packed


def _round_up(v, m):
    return ((v + m - 1) // m) * m


def _default_vmem_limit():
    """Half the physical per-core VMEM: 64 MiB on v5e/v6e (128 MiB parts),
    32 MiB on v7x (64 MiB per TensorCore)."""
    cap = 64 * 1024 * 1024
    try:
        cap = int(pltpu.get_tpu_info().vmem_capacity_bytes)
    except Exception:
        pass
    return max(16 * 1024 * 1024, min(cap // 2, 64 * 1024 * 1024))


def _choose_tiling(n, in_dim, emb_p, out_dim, c_itemsize, vmem_limit, cache_h):
    """Pick the largest row tile (multiple of 16) that fits the VMEM budget and
    decide whether the whole h activation can stay cached in VMEM between the
    stats and apply phases."""
    # Resident operands (Pallas double-buffers inputs even with a constant
    # block index) + the four (1, emb_p) f32 BN scratch vectors.
    resident = 2 * c_itemsize * (in_dim * emb_p + emb_p * out_dim)   # w1, w2
    resident += 2 * 4 * (2 * emb_p + out_dim)                        # gamma, beta, b2
    resident += 4 * 4 * emb_p                                        # sum/sq/scale/shift
    budget = vmem_limit - resident - (2 << 20)                       # compiler headroom

    per_row = (2 * c_itemsize * in_dim      # streamed x tile (double-buffered)
               + 2 * 4 * out_dim            # streamed out tile (double-buffered)
               + 4 * 4 * emb_p              # h / h*h / a / cast intermediates (f32)
               + 4 * out_dim)               # y tile before the final cast

    n_q = _round_up(max(n, 1), ROW_TILE_QUANTUM)
    if cache_h is None:
        cache_h = budget > 0 and (c_itemsize * n_q * emb_p) <= budget // 2
    if cache_h:
        budget -= c_itemsize * n_q * emb_p

    tile = budget // per_row if budget > 0 else 0
    tile = int(max(ROW_TILE_QUANTUM,
                   min((tile // ROW_TILE_QUANTUM) * ROW_TILE_QUANTUM, 1024, n_q)))
    return tile, bool(cache_h)


# -----------------------------------------------------------------------------
# Fused kernel: phase 0 = batch statistics, phase 1 = BN affine + tanh + Linear2
# -----------------------------------------------------------------------------
def _calib_kernel(x_ref, w1_ref, gamma_ref, beta_ref, w2_ref, b2_ref, out_ref,
                  sum_ref, sq_ref, scale_ref, shift_ref, *h_cache,
                  n_true, cache_h):
    phase = pl.program_id(0)           # 0: stats, 1: apply
    step = pl.program_id(1)            # row-tile index
    last = pl.num_programs(1) - 1

    @pl.when(phase == 0)
    def _stats():
        @pl.when(step == 0)
        def _():
            sum_ref[...] = jnp.zeros_like(sum_ref)
            sq_ref[...] = jnp.zeros_like(sq_ref)

        # Linear 1 without bias: under train-mode BN, b1 is cancelled exactly
        # by the mean subtraction (it folds into `shift` below).
        h = jnp.dot(x_ref[...], w1_ref[...], preferred_element_type=jnp.float32)
        if cache_h:
            h_cache[0][step] = h.astype(h_cache[0].dtype)
        # Row-padded entries of x are zero -> h == 0 there, so padded rows add
        # nothing to either sum; dividing by the true batch size needs no mask.
        sum_ref[...] += jnp.sum(h, axis=0, keepdims=True)
        sq_ref[...] += jnp.sum(h * h, axis=0, keepdims=True)

        @pl.when(step == last)
        def _():
            inv_n = jnp.float32(1.0 / n_true)
            mean = sum_ref[...] * inv_n
            var = jnp.maximum(sq_ref[...] * inv_n - mean * mean, 0.0)  # biased (train-mode BN)
            scale = gamma_ref[...] * lax.rsqrt(var + BN_EPS)
            scale_ref[...] = scale
            shift_ref[...] = beta_ref[...] - mean * scale

    @pl.when(phase == 1)
    def _apply():
        if cache_h:
            h = h_cache[0][step].astype(jnp.float32)
        else:
            h = jnp.dot(x_ref[...], w1_ref[...], preferred_element_type=jnp.float32)
        a = jnp.tanh(h * scale_ref[...] + shift_ref[...])     # fused BN affine + tanh
        y = jnp.dot(a.astype(w2_ref.dtype), w2_ref[...],
                    preferred_element_type=jnp.float32) + b2_ref[...]
        out_ref[...] = y.astype(out_ref.dtype)                # unpadded lane dim store


# -----------------------------------------------------------------------------
# Wrapper
# -----------------------------------------------------------------------------
def calib_model_pallas(x, w1, b1, gamma, beta, w2, b2, *,
                       tile_n=None, cache_h=None,
                       compute_dtype=jnp.bfloat16,
                       vmem_limit_bytes=None):
    """CalibModel forward with train-mode BatchNorm batch statistics.

    x: (N, in_dim); w1: (in_dim, emb_dim); w2: (emb_dim, out_dim);
    b1/gamma/beta: (emb_dim,); b2: (out_dim,).
    b1 is accepted for API parity but unused: with train-mode BatchNorm the
    first-layer bias is removed exactly by the mean subtraction.
    """
    del b1  # mathematically dead under batch-stat BN (NOT valid for eval/running stats)

    n, in_dim = x.shape
    in_dim_w, emb_dim = w1.shape
    emb_dim_w, out_dim = w2.shape
    assert in_dim_w == in_dim and emb_dim_w == emb_dim
    assert n >= 2, "train-mode BatchNorm needs a batch"

    f32 = jnp.float32
    c_dt = jnp.dtype(compute_dtype)
    if vmem_limit_bytes is None:
        vmem_limit_bytes = _default_vmem_limit()

    # Only the hidden (contraction / BN) dim is lane-padded to 128 (full MXU
    # tiles, dense BN vectors); x and the output keep their true widths.
    emb_p = _round_up(emb_dim, LANE)

    auto_tile, cache_h = _choose_tiling(n, in_dim, emb_p, out_dim,
                                        c_dt.itemsize, vmem_limit_bytes, cache_h)
    if tile_n is None:
        tile_n = auto_tile
    tile_n = max(ROW_TILE_QUANTUM, _round_up(int(tile_n), ROW_TILE_QUANTUM))
    n_p = _round_up(n, tile_n)
    num_tiles = n_p // tile_n

    # Wrapper-side prep: row-pad x (padded rows are zero => no effect on the
    # batch statistics) and pre-cast the matmul operands to the MXU dtype.
    xp = jnp.pad(x.astype(c_dt), ((0, n_p - n), (0, 0)))
    w1p = jnp.pad(w1.astype(c_dt), ((0, 0), (0, emb_p - emb_dim)))
    w2p = jnp.pad(w2.astype(c_dt), ((0, emb_p - emb_dim), (0, 0)))
    gp = jnp.pad(gamma.astype(f32).reshape(1, -1), ((0, 0), (0, emb_p - emb_dim)))
    bp = jnp.pad(beta.astype(f32).reshape(1, -1), ((0, 0), (0, emb_p - emb_dim)))
    b2p = b2.astype(f32).reshape(1, -1)

    # grid = (phase, row tile); both sequential ("arbitrary") because the BN
    # scratch / cached h carry state from phase 0 into phase 1.
    grid = (2, num_tiles)

    if cache_h:
        # x is only needed in phase 0; freeze its block index in phase 1 so no
        # further x DMAs are issued.
        x_map = lambda p, i: (i * (1 - p), 0)
    else:
        x_map = lambda p, i: (i, 0)
    const = lambda p, i: (0, 0)

    in_specs = [
        pl.BlockSpec((tile_n, in_dim), x_map),     # x, unpadded lane dim (streamed)
        pl.BlockSpec((in_dim, emb_p), const),      # w1 (resident)
        pl.BlockSpec((1, emb_p), const),           # gamma
        pl.BlockSpec((1, emb_p), const),           # beta
        pl.BlockSpec((emb_p, out_dim), const),     # w2 (resident)
        pl.BlockSpec((1, out_dim), const),         # b2
    ]
    # Output block index is frozen at 0 during phase 0 (never written there),
    # so nothing is written back to HBM until phase 1 stores real rows.
    out_spec = pl.BlockSpec((tile_n, out_dim), lambda p, i: (i * p, 0))

    scratch = [pltpu.VMEM((1, emb_p), f32),        # sum(h)
               pltpu.VMEM((1, emb_p), f32),        # sum(h*h)
               pltpu.VMEM((1, emb_p), f32),        # scale
               pltpu.VMEM((1, emb_p), f32)]        # shift
    if cache_h:
        scratch.append(pltpu.VMEM((num_tiles, tile_n, emb_p), c_dt))   # cached h

    yp = pl.pallas_call(
        functools.partial(_calib_kernel, n_true=n, cache_h=cache_h),
        out_shape=jax.ShapeDtypeStruct((n_p, out_dim), f32),
        grid=grid,
        in_specs=in_specs,
        out_specs=out_spec,
        scratch_shapes=scratch,
        compiler_params=pltpu.CompilerParams(
            dimension_semantics=("arbitrary", "arbitrary"),
            vmem_limit_bytes=vmem_limit_bytes),
    )(xp, w1p, gp, bp, w2p, b2p)

    return yp[:n]


# -----------------------------------------------------------------------------
# Parameter init (mirrors CalibModel._reset_parameters) + pure-JAX reference
# -----------------------------------------------------------------------------
def init_params(key, in_dim, emb_dim, out_dim):
    """kaiming_normal_ (fan_in, gain sqrt(2)) on both Linear weights; Linear
    biases keep PyTorch's default U(-1/sqrt(fan_in), 1/sqrt(fan_in)); BN
    gamma=1, beta=0."""
    k1, k2, k3, k4 = jax.random.split(key, 4)
    w1 = jax.random.normal(k1, (in_dim, emb_dim), jnp.float32) * jnp.sqrt(2.0 / in_dim)
    b1 = jax.random.uniform(k3, (emb_dim,), jnp.float32, -1.0, 1.0) / jnp.sqrt(in_dim)
    gamma = jnp.ones((emb_dim,), jnp.float32)
    beta = jnp.zeros((emb_dim,), jnp.float32)
    w2 = jax.random.normal(k2, (emb_dim, out_dim), jnp.float32) * jnp.sqrt(2.0 / emb_dim)
    b2 = jax.random.uniform(k4, (out_dim,), jnp.float32, -1.0, 1.0) / jnp.sqrt(emb_dim)
    return w1, b1, gamma, beta, w2, b2


def reference(x, w1, b1, gamma, beta, w2, b2):
    h = x @ w1 + b1
    mean = jnp.mean(h, axis=0, keepdims=True)
    var = jnp.mean((h - mean) ** 2, axis=0, keepdims=True)    # biased, train-mode BN
    hn = (h - mean) / jnp.sqrt(var + BN_EPS) * gamma + beta
    return jnp.tanh(hn) @ w2 + b2


if __name__ == "__main__":
    N, IN_DIM, EMB_DIM, OUT_DIM = 40, 32, 32, 16

    key = jax.random.PRNGKey(0)
    kx, kp = jax.random.split(key)
    x = jax.random.normal(kx, (N, IN_DIM), jnp.float32)
    params = init_params(kp, IN_DIM, EMB_DIM, OUT_DIM)
    y_ref = reference(x, *params)

    # Default path: auto tile size, h cached in VMEM between the two phases.
    y = jax.block_until_ready(calib_model_pallas(x, *params))
    assert y.shape == (N, OUT_DIM)
    # bf16 matmul inputs vs f32 reference -> loosened tolerance.
    assert jnp.allclose(y, y_ref, atol=5e-2, rtol=5e-2), "mismatch (cached-h path)"

    # Multi-tile + recompute path (exercises the streaming accumulator logic).
    y2 = jax.block_until_ready(calib_model_pallas(x, *params, tile_n=16, cache_h=False))
    assert jnp.allclose(y2, y_ref, atol=5e-2, rtol=5e-2), "mismatch (recompute path)"

    print("KERNEL_OK")
</pallas_src>

<mosaic_0001>
module attributes {stable_mosaic.version = 11 : i64} {
  func.func @_calib_kernel(%arg0: i32, %arg1: i32, %arg2: memref<48x32xbf16, #tpu.memory_space<vmem>>, %arg3: memref<32x128xbf16, #tpu.memory_space<vmem>>, %arg4: memref<1x128xf32, #tpu.memory_space<vmem>>, %arg5: memref<1x128xf32, #tpu.memory_space<vmem>>, %arg6: memref<128x16xbf16, #tpu.memory_space<vmem>>, %arg7: memref<1x16xf32, #tpu.memory_space<vmem>>, %arg8: memref<48x16xf32, #tpu.memory_space<vmem>>, %arg9: memref<1x128xf32, #tpu.memory_space<vmem>>, %arg10: memref<1x128xf32, #tpu.memory_space<vmem>>, %arg11: memref<1x128xf32, #tpu.memory_space<vmem>>, %arg12: memref<1x128xf32, #tpu.memory_space<vmem>>, %arg13: memref<1x48x128xbf16, #tpu.memory_space<vmem>>) attributes {dimension_semantics = [#tpu.dimension_semantics<arbitrary>, #tpu.dimension_semantics<arbitrary>], iteration_bounds = array<i64: 2, 1>, scalar_prefetch = 0 : i64, scratch_operands = 5 : i64, tpu.core_type = #tpu.core_type<tc>, window_params = [{transform_indices = @transform_0, window_bounds = array<i64: 48, 32>}, {pipeline_mode = #tpu.pipeline_mode<synchronous>, transform_indices = @transform_1, window_bounds = array<i64: 32, 128>}, {pipeline_mode = #tpu.pipeline_mode<synchronous>, transform_indices = @transform_2, window_bounds = array<i64: 1, 128>}, {pipeline_mode = #tpu.pipeline_mode<synchronous>, transform_indices = @transform_3, window_bounds = array<i64: 1, 128>}, {pipeline_mode = #tpu.pipeline_mode<synchronous>, transform_indices = @transform_4, window_bounds = array<i64: 128, 16>}, {pipeline_mode = #tpu.pipeline_mode<synchronous>, transform_indices = @transform_5, window_bounds = array<i64: 1, 16>}, {transform_indices = @transform_6, window_bounds = array<i64: 48, 16>}]} {
    %c0_i32 = arith.constant 0 : i32
    %0 = arith.cmpi eq, %arg0, %c0_i32 : i32
    %1 = arith.extui %0 : i1 to i32
    %c0_i32_0 = arith.constant 0 : i32
    %2 = arith.cmpi ne, %1, %c0_i32_0 : i32
    scf.if %2 {
      %c0_i32_2 = arith.constant 0 : i32
      %6 = arith.cmpi eq, %arg1, %c0_i32_2 : i32
      %7 = arith.extui %6 : i1 to i32
      %c0_i32_3 = arith.constant 0 : i32
      %8 = arith.cmpi ne, %7, %c0_i32_3 : i32
      scf.if %8 {
        %cst_21 = arith.constant 0.000000e+00 : f32
        %31 = vector.broadcast %cst_21 : f32 to vector<1x128xf32>
        %c0_22 = arith.constant 0 : index
        %c0_23 = arith.constant 0 : index
        %32 = vector.load %arg9[%c0_22, %c0_23] : memref<1x128xf32, #tpu.memory_space<vmem>>, vector<1x128xf32>
        tpu.vector_store %arg9[%c0_22, %c0_23], %31 {strides = array<i32>} : memref<1x128xf32, #tpu.memory_space<vmem>>, vector<1x128xf32>,
        %cst_24 = arith.constant 0.000000e+00 : f32
        %33 = vector.broadcast %cst_24 : f32 to vector<1x128xf32>
        %c0_25 = arith.constant 0 : index
        %c0_26 = arith.constant 0 : index
        %34 = vector.load %arg10[%c0_25, %c0_26] : memref<1x128xf32, #tpu.memory_space<vmem>>, vector<1x128xf32>
        tpu.vector_store %arg10[%c0_25, %c0_26], %33 {strides = array<i32>} : memref<1x128xf32, #tpu.memory_space<vmem>>, vector<1x128xf32>,
      } else {
      }
      %c0 = arith.constant 0 : index
      %c0_4 = arith.constant 0 : index
      %9 = vector.load %arg2[%c0, %c0_4] : memref<48x32xbf16, #tpu.memory_space<vmem>>, vector<48x32xbf16>
      %c0_5 = arith.constant 0 : index
      %c0_6 = arith.constant 0 : index
      %10 = vector.load %arg3[%c0_5, %c0_6] : memref<32x128xbf16, #tpu.memory_space<vmem>>, vector<32x128xbf16>
      %cst = arith.constant dense<0.000000e+00> : vector<48x128xf32>
      %11 = tpu.matmul %9, %10, %cst {dimension_numbers = #tpu.dot_dimension_numbers<[1], [0], [0], [1], [0, 0, 1, 1], [], []>} : vector<48x32xbf16>, vector<32x128xbf16>, vector<48x128xf32> -> vector<48x128xf32>
      %12 = arith.truncf %11 : vector<48x128xf32> to vector<48x128xbf16>
      %13 = arith.index_cast %arg1 : i32 to index
      %c0_7 = arith.constant 0 : index
      %c0_8 = arith.constant 0 : index
      %14 = vector.load %arg13[%13, %c0_7, %c0_8] : memref<1x48x128xbf16, #tpu.memory_space<vmem>>, vector<1x48x128xbf16>
      %15 = vector.shape_cast %14 : vector<1x48x128xbf16> to vector<48x128xbf16>
      %16 = vector.shape_cast %12 : vector<48x128xbf16> to vector<1x48x128xbf16>
      tpu.vector_store %arg13[%13, %c0_7, %c0_8], %16 {strides = array<i32>} : memref<1x48x128xbf16, #tpu.memory_space<vmem>>, vector<1x48x128xbf16>,
      %c0_9 = arith.constant 0 : index
      %c0_10 = arith.constant 0 : index
      %17 = vector.load %arg9[%c0_9, %c0_10] : memref<1x128xf32, #tpu.memory_space<vmem>>, vector<1x128xf32>
      %cst_11 = arith.constant dense<0.000000e+00> : vector<128xf32>
      %18 = vector.multi_reduction <add>, %11, %cst_11 [0] : vector<48x128xf32> to vector<128xf32>
      %19 = vector.shape_cast %18 : vector<128xf32> to vector<1x128xf32>
      %20 = arith.addf %17, %19 : vector<1x128xf32>
      %c0_12 = arith.constant 0 : index
      %c0_13 = arith.constant 0 : index
      %21 = vector.load %arg9[%c0_12, %c0_13] : memref<1x128xf32, #tpu.memory_space<vmem>>, vector<1x128xf32>
      tpu.vector_store %arg9[%c0_12, %c0_13], %20 {strides = array<i32>} : memref<1x128xf32, #tpu.memory_space<vmem>>, vector<1x128xf32>,
      %c0_14 = arith.constant 0 : index
      %c0_15 = arith.constant 0 : index
      %22 = vector.load %arg10[%c0_14, %c0_15] : memref<1x128xf32, #tpu.memory_space<vmem>>, vector<1x128xf32>
      %23 = arith.mulf %11, %11 : vector<48x128xf32>
      %cst_16 = arith.constant dense<0.000000e+00> : vector<128xf32>
      %24 = vector.multi_reduction <add>, %23, %cst_16 [0] : vector<48x128xf32> to vector<128xf32>
      %25 = vector.shape_cast %24 : vector<128xf32> to vector<1x128xf32>
      %26 = arith.addf %22, %25 : vector<1x128xf32>
      %c0_17 = arith.constant 0 : index
      %c0_18 = arith.constant 0 : index
      %27 = vector.load %arg10[%c0_17, %c0_18] : memref<1x128xf32, #tpu.memory_space<vmem>>, vector<1x128xf32>
      tpu.vector_store %arg10[%c0_17, %c0_18], %26 {strides = array<i32>} : memref<1x128xf32, #tpu.memory_space<vmem>>, vector<1x128xf32>,
      %c0_i32_19 = arith.constant 0 : i32
      %28 = arith.cmpi eq, %arg1, %c0_i32_19 : i32
      %29 = arith.extui %28 : i1 to i32
      %c0_i32_20 = arith.constant 0 : i32
      %30 = arith.cmpi ne, %29, %c0_i32_20 : i32
      scf.if %30 {
        %c0_21 = arith.constant 0 : index
        %c0_22 = arith.constant 0 : index
        %31 = vector.load %arg9[%c0_21, %c0_22] : memref<1x128xf32, #tpu.memory_space<vmem>>, vector<1x128xf32>
        %cst_23 = arith.constant 2.500000e-02 : f32
        %32 = vector.broadcast %cst_23 : f32 to vector<1x128xf32>
        %33 = arith.mulf %31, %32 : vector<1x128xf32>
        %c0_24 = arith.constant 0 : index
        %c0_25 = arith.constant 0 : index
        %34 = vector.load %arg10[%c0_24, %c0_25] : memref<1x128xf32, #tpu.memory_space<vmem>>, vector<1x128xf32>
        %cst_26 = arith.constant 2.500000e-02 : f32
        %35 = vector.broadcast %cst_26 : f32 to vector<1x128xf32>
        %36 = arith.mulf %34, %35 : vector<1x128xf32>
        %37 = arith.mulf %33, %33 : vector<1x128xf32>
        %38 = arith.subf %36, %37 : vector<1x128xf32>
        %cst_27 = arith.constant 0.000000e+00 : f32
        %39 = vector.broadcast %cst_27 : f32 to vector<1x128xf32>
        %40 = arith.maximumf %38, %39 : vector<1x128xf32>
        %c0_28 = arith.constant 0 : index
        %c0_29 = arith.constant 0 : index
        %41 = vector.load %arg4[%c0_28, %c0_29] : memref<1x128xf32, #tpu.memory_space<vmem>>, vector<1x128xf32>
        %cst_30 = arith.constant 9.99999974E-6 : f32
        %42 = vector.broadcast %cst_30 : f32 to vector<1x128xf32>
        %43 = arith.addf %40, %42 : vector<1x128xf32>
        %44 = math.rsqrt %43 : vector<1x128xf32>
        %45 = arith.mulf %41, %44 : vector<1x128xf32>
        %c0_31 = arith.constant 0 : index
        %c0_32 = arith.constant 0 : index
        %46 = vector.load %arg11[%c0_31, %c0_32] : memref<1x128xf32, #tpu.memory_space<vmem>>, vector<1x128xf32>
        tpu.vector_store %arg11[%c0_31, %c0_32], %45 {strides = array<i32>} : memref<1x128xf32, #tpu.memory_space<vmem>>, vector<1x128xf32>,
        %c0_33 = arith.constant 0 : index
        %c0_34 = arith.constant 0 : index
        %47 = vector.load %arg5[%c0_33, %c0_34] : memref<1x128xf32, #tpu.memory_space<vmem>>, vector<1x128xf32>
        %48 = arith.mulf %33, %45 : vector<1x128xf32>
        %49 = arith.subf %47, %48 : vector<1x128xf32>
        %c0_35 = arith.constant 0 : index
        %c0_36 = arith.constant 0 : index
        %50 = vector.load %arg12[%c0_35, %c0_36] : memref<1x128xf32, #tpu.memory_space<vmem>>, vector<1x128xf32>
        tpu.vector_store %arg12[%c0_35, %c0_36], %49 {strides = array<i32>} : memref<1x128xf32, #tpu.memory_space<vmem>>, vector<1x128xf32>,
      } else {
      }
    } else {
    }
    %c1_i32 = arith.constant 1 : i32
    %3 = arith.cmpi eq, %arg0, %c1_i32 : i32
    %4 = arith.extui %3 : i1 to i32
    %c0_i32_1 = arith.constant 0 : i32
    %5 = arith.cmpi ne, %4, %c0_i32_1 : i32
    scf.if %5 {
      %6 = arith.index_cast %arg1 : i32 to index
      %c0 = arith.constant 0 : index
      %c0_2 = arith.constant 0 : index
      %7 = vector.load %arg13[%6, %c0, %c0_2] : memref<1x48x128xbf16, #tpu.memory_space<vmem>>, vector<1x48x128xbf16>
      %8 = vector.shape_cast %7 : vector<1x48x128xbf16> to vector<48x128xbf16>
      %9 = arith.extf %8 : vector<48x128xbf16> to vector<48x128xf32>
      %c0_3 = arith.constant 0 : index
      %c0_4 = arith.constant 0 : index
      %10 = vector.load %arg11[%c0_3, %c0_4] : memref<1x128xf32, #tpu.memory_space<vmem>>, vector<1x128xf32>
      %11 = vector.broadcast %10 : vector<1x128xf32> to vector<48x128xf32>
      %12 = arith.mulf %9, %11 : vector<48x128xf32>
      %c0_5 = arith.constant 0 : index
      %c0_6 = arith.constant 0 : index
      %13 = vector.load %arg12[%c0_5, %c0_6] : memref<1x128xf32, #tpu.memory_space<vmem>>, vector<1x128xf32>
      %14 = vector.broadcast %13 : vector<1x128xf32> to vector<48x128xf32>
      %15 = arith.addf %12, %14 : vector<48x128xf32>
      %16 = math.tanh %15 : vector<48x128xf32>
      %17 = arith.truncf %16 : vector<48x128xf32> to vector<48x128xbf16>
      %c0_7 = arith.constant 0 : index
      %c0_8 = arith.constant 0 : index
      %18 = vector.load %arg6[%c0_7, %c0_8] : memref<128x16xbf16, #tpu.memory_space<vmem>>, vector<128x16xbf16>
      %cst = arith.constant dense<0.000000e+00> : vector<48x16xf32>
      %19 = tpu.matmul %17, %18, %cst {dimension_numbers = #tpu.dot_dimension_numbers<[1], [0], [0], [1], [0, 0, 1, 1], [], []>} : vector<48x128xbf16>, vector<128x16xbf16>, vector<48x16xf32> -> vector<48x16xf32>
      %c0_9 = arith.constant 0 : index
      %c0_10 = arith.constant 0 : index
      %20 = vector.load %arg7[%c0_9, %c0_10] : memref<1x16xf32, #tpu.memory_space<vmem>>, vector<1x16xf32>
      %21 = vector.broadcast %20 : vector<1x16xf32> to vector<48x16xf32>
      %22 = arith.addf %19, %21 : vector<48x16xf32>
      %c0_11 = arith.constant 0 : index
      %c0_12 = arith.constant 0 : index
      %23 = vector.load %arg8[%c0_11, %c0_12] : memref<48x16xf32, #tpu.memory_space<vmem>>, vector<48x16xf32>
      tpu.vector_store %arg8[%c0_11, %c0_12], %22 {strides = array<i32>} : memref<48x16xf32, #tpu.memory_space<vmem>>, vector<48x16xf32>,
    } else {
    }
    return
  }
  func.func @transform_0(%arg0: i32, %arg1: i32) -> (i32, i32) {
    %c1_i32 = arith.constant 1 : i32
    %0 = arith.subi %c1_i32, %arg0 : i32
    %1 = arith.muli %arg1, %0 : i32
    %c0_i32 = arith.constant 0 : i32
    %c0_i32_0 = arith.constant 0 : i32
    return %1, %c0_i32 : i32, i32
  }
  func.func @transform_1(%arg0: i32, %arg1: i32) -> (i32, i32) {
    %c0_i32 = arith.constant 0 : i32
    %c0_i32_0 = arith.constant 0 : i32
    %c0_i32_1 = arith.constant 0 : i32
    return %c0_i32, %c0_i32_0 : i32, i32
  }
  func.func @transform_2(%arg0: i32, %arg1: i32) -> (i32, i32) {
    %c0_i32 = arith.constant 0 : i32
    %c0_i32_0 = arith.constant 0 : i32
    %c0_i32_1 = arith.constant 0 : i32
    return %c0_i32, %c0_i32_0 : i32, i32
  }
  func.func @transform_3(%arg0: i32, %arg1: i32) -> (i32, i32) {
    %c0_i32 = arith.constant 0 : i32
    %c0_i32_0 = arith.constant 0 : i32
    %c0_i32_1 = arith.constant 0 : i32
    return %c0_i32, %c0_i32_0 : i32, i32
  }
  func.func @transform_4(%arg0: i32, %arg1: i32) -> (i32, i32) {
    %c0_i32 = arith.constant 0 : i32
    %c0_i32_0 = arith.constant 0 : i32
    %c0_i32_1 = arith.constant 0 : i32
    return %c0_i32, %c0_i32_0 : i32, i32
  }
  func.func @transform_5(%arg0: i32, %arg1: i32) -> (i32, i32) {
    %c0_i32 = arith.constant 0 : i32
    %c0_i32_0 = arith.constant 0 : i32
    %c0_i32_1 = arith.constant 0 : i32
    return %c0_i32, %c0_i32_0 : i32, i32
  }
  func.func @transform_6(%arg0: i32, %arg1: i32) -> (i32, i32) {
    %0 = arith.muli %arg1, %arg0 : i32
    %c0_i32 = arith.constant 0 : i32
    %c0_i32_0 = arith.constant 0 : i32
    return %0, %c0_i32 : i32, i32
  }
}

</mosaic_0001>

<llo_original>
// kernel: tpu_custom_call.1
$region0: #{tpu_custom_call.1}
  #allocation0 [shape = 'u32[]', space=smem, size = 0x4, offset = 0x4, fixed_abs, tag = 'smem constant byte address 0x4 - core index']
  #allocation1 [shape = 'u32[72,128]{1,0:T(1,128)}', space=vmem, size = 0x9000, scoped, tag = 'internal scratch']
  #allocation2 [shape = 'f32[1,128]{1,0:T(1,128)}', space=vmem, size = 0x200, scoped, tag = 'scratch operand']
  #allocation3 [shape = 'f32[1,128]{1,0:T(1,128)}', space=vmem, size = 0x200, scoped, tag = 'scratch operand']
  #allocation4 [shape = 'f32[1,128]{1,0:T(1,128)}', space=vmem, size = 0x200, scoped, tag = 'scratch operand']
  #allocation5 [shape = 'f32[1,128]{1,0:T(1,128)}', space=vmem, size = 0x200, scoped, tag = 'scratch operand']
  #allocation6 [shape = 'bf16[1,48,128]{2,1,0:T(8,128)(2,1)}', space=vmem, size = 0x3000, scoped, tag = 'scratch operand']
  %s0 = inlined_call_operand.vmem [shape: bf16[48,32], index: 0, kind: input, shape index: {}]
  %s1 = inlined_call_operand.vmem [shape: bf16[32,128], index: 1, kind: input, shape index: {}]
  %s2 = inlined_call_operand.vmem [shape: f32[1,128], index: 2, kind: input, shape index: {}]
  %s3 = inlined_call_operand.vmem [shape: f32[1,128], index: 3, kind: input, shape index: {}]
  %s4 = inlined_call_operand.vmem [shape: bf16[128,16], index: 4, kind: input, shape index: {}]
  %s5 = inlined_call_operand.vmem [shape: f32[1,16], index: 5, kind: input, shape index: {}]
  %s6 = inlined_call_operand.vmem [shape: f32[48,16], index: 6, kind: output, shape index: {}]
  %s7 = sld [smem:[#allocation0]]
  $region73: #{tpu_custom_call.1} parent=0
    _
  %s9 = ssub.s32 1, %s7
  %s10 = scalar_select 0, %s9, %s7
  loop: start=0, step=1, limit=4
  $region2: #{tpu_custom_call.1} parent=0 // loop_pre_header
    _
  $region3: #{tpu_custom_call.1} parent=0 // loop_header
    %s12 = sphi 0, %s16
    %p13 = scmp.ge.s32.totalorder %s12, 4
    %s19 = sphi 0, %s31
    %s20 = sphi 0, %s27
    %s21 = sphi 0, %s19
    %s22 = sphi 0, %s20
    %s23 = sphi 0, %s21
    %s24 = sphi 0, %s22
    %s38 = sphi 0, %s40
    %s41 = sphi 0, %s38
    %s42 = sphi 0, %s41
    %s58 = sphi 0, %s42
    %s62 = sphi 0, %s62
    %s64 = sphi 0, %s62
    %s65 = sphi 0, %s64
    %s79 = sphi 0, %s65
    %s83 = sphi 0, %s83
    %s85 = sphi 0, %s83
    %s86 = sphi 0, %s85
    %s100 = sphi 0, %s86
    %s104 = sphi 0, %s104
    %s106 = sphi 0, %s104
    %s107 = sphi 0, %s106
    %s121 = sphi 0, %s107
    %s125 = sphi 0, %s125
    %s127 = sphi 0, %s125
    %s128 = sphi 0, %s127
    %s142 = sphi 0, %s128
    %s146 = sphi 0, %s146
    %s148 = sphi 0, %s146
    %s149 = sphi 0, %s148
    %s163 = sphi 0, %s149
    %s171 = sphi 0, %s173
    %s174 = sphi 0, %s171
    %s175 = sphi 0, %s174
    %s191 = sphi 0, %s175
  $region4: #{tpu_custom_call.1} parent=0 // loop_header_branch
    %15 = sbr.rel (%p13) target = $region8
  $region5: #{tpu_custom_call.1} parent=0 // loop_body
    %s17 = ssub.s32 %s12, 1
    %s18 = ssub.s32 %s12, 2
    %s25 = sadd.s32 1, %s20
    %p26 = scmp.ge.s32.totalorder %s25, 1
    %s27 = scalar_select %p26, 0, %s25
    %s28 = sadd.s32 1, %s19
    %s29 = scalar_select %p26, %s28, %s19
    %p30 = scmp.ge.s32.totalorder %s29, 2
    %s31 = scalar_select %p30, 0, %s29
    %s32 = ssub.s32 1, %s19
    %s33 = smul.u32 %s20, %s32
    %s34 = ssub.s32 1, %s31
    %s35 = smul.u32 %s27, %s34
    %s36 = ssub.s32 %s33, %s35
    %p37 = scmp.eq.s32.totalorder %s36, 0
    %s39 = sadd.s32 %s38, 1
    %s40 = scalar_select %p37, %s38, %s39
    %p43 = pneg %p37
    %p44 = scmp.eq.s32.totalorder %s12, 1
    %p45 = por %p43, %p44
    %p46 = scmp.ne.s32.totalorder %s38, %s41
    %p47 = scmp.eq.s32.totalorder %s12, 0
    %p48 = por %p46, %p47
    %p49 = scmp.ne.s32.totalorder %s38, %s41
    %p50 = scmp.eq.s32.totalorder %s17, 1
    %p51 = por %p49, %p50
    %p52 = scmp.ne.s32.totalorder %s41, %s42
    %p53 = scmp.eq.s32.totalorder %s17, 0
    %p54 = por %p52, %p53
    %p55 = scmp.ne.s32.totalorder %s41, %s42
    %p56 = scmp.eq.s32.totalorder %s18, 1
    %p57 = por %p55, %p56
    %p59 = scmp.ne.s32.totalorder %s42, %s58
    %p60 = scmp.eq.s32.totalorder %s18, 0
    %p61 = por %p59, %p60
    %s63 = sadd.s32 %s62, 1
    %p66 = scmp.eq.s32.totalorder %s12, 1
    %p67 = scmp.ne.s32.totalorder %s62, %s64
    %p68 = scmp.eq.s32.totalorder %s12, 0
    %p69 = por %p67, %p68
    %p70 = scmp.ne.s32.totalorder %s62, %s64
    %p71 = scmp.eq.s32.totalorder %s17, 1
    %p72 = por %p70, %p71
    %p73 = scmp.ne.s32.totalorder %s64, %s65
    %p74 = scmp.eq.s32.totalorder %s17, 0
    %p75 = por %p73, %p74
    %p76 = scmp.ne.s32.totalorder %s64, %s65
    %p77 = scmp.eq.s32.totalorder %s18, 1
    %p78 = por %p76, %p77
    %p80 = scmp.ne.s32.totalorder %s65, %s79
    %p81 = scmp.eq.s32.totalorder %s18, 0
    %p82 = por %p80, %p81
    %s84 = sadd.s32 %s83, 1
    %p87 = scmp.eq.s32.totalorder %s12, 1
    %p88 = scmp.ne.s32.totalorder %s83, %s85
    %p89 = scmp.eq.s32.totalorder %s12, 0
    %p90 = por %p88, %p89
    %p91 = scmp.ne.s32.totalorder %s83, %s85
    %p92 = scmp.eq.s32.totalorder %s17, 1
    %p93 = por %p91, %p92
    %p94 = scmp.ne.s32.totalorder %s85, %s86
    %p95 = scmp.eq.s32.totalorder %s17, 0
    %p96 = por %p94, %p95
    %p97 = scmp.ne.s32.totalorder %s85, %s86
    %p98 = scmp.eq.s32.totalorder %s18, 1
    %p99 = por %p97, %p98
    %p101 = scmp.ne.s32.totalorder %s86, %s100
    %p102 = scmp.eq.s32.totalorder %s18, 0
    %p103 = por %p101, %p102
    %s105 = sadd.s32 %s104, 1
    %p108 = scmp.eq.s32.totalorder %s12, 1
    %p109 = scmp.ne.s32.totalorder %s104, %s106
    %p110 = scmp.eq.s32.totalorder %s12, 0
    %p111 = por %p109, %p110
    %p112 = scmp.ne.s32.totalorder %s104, %s106
    %p113 = scmp.eq.s32.totalorder %s17, 1
    %p114 = por %p112, %p113
    %p115 = scmp.ne.s32.totalorder %s106, %s107
    %p116 = scmp.eq.s32.totalorder %s17, 0
    %p117 = por %p115, %p116
    %p118 = scmp.ne.s32.totalorder %s106, %s107
    %p119 = scmp.eq.s32.totalorder %s18, 1
    %p120 = por %p118, %p119
    %p122 = scmp.ne.s32.totalorder %s107, %s121
    %p123 = scmp.eq.s32.totalorder %s18, 0
    %p124 = por %p122, %p123
    %s126 = sadd.s32 %s125, 1
    %p129 = scmp.eq.s32.totalorder %s12, 1
    %p130 = scmp.ne.s32.totalorder %s125, %s127
    %p131 = scmp.eq.s32.totalorder %s12, 0
    %p132 = por %p130, %p131
    %p133 = scmp.ne.s32.totalorder %s125, %s127
    %p134 = scmp.eq.s32.totalorder %s17, 1
    %p135 = por %p133, %p134
    %p136 = scmp.ne.s32.totalorder %s127, %s128
    %p137 = scmp.eq.s32.totalorder %s17, 0
    %p138 = por %p136, %p137
    %p139 = scmp.ne.s32.totalorder %s127, %s128
    %p140 = scmp.eq.s32.totalorder %s18, 1
    %p141 = por %p139, %p140
    %p143 = scmp.ne.s32.totalorder %s128, %s142
    %p144 = scmp.eq.s32.totalorder %s18, 0
    %p145 = por %p143, %p144
    %s147 = sadd.s32 %s146, 1
    %p150 = scmp.eq.s32.totalorder %s12, 1
    %p151 = scmp.ne.s32.totalorder %s146, %s148
    %p152 = scmp.eq.s32.totalorder %s12, 0
    %p153 = por %p151, %p152
    %p154 = scmp.ne.s32.totalorder %s146, %s148
    %p155 = scmp.eq.s32.totalorder %s17, 1
    %p156 = por %p154, %p155
    %p157 = scmp.ne.s32.totalorder %s148, %s149
    %p158 = scmp.eq.s32.totalorder %s17, 0
    %p159 = por %p157, %p158
    %p160 = scmp.ne.s32.totalorder %s148, %s149
    %p161 = scmp.eq.s32.totalorder %s18, 1
    %p162 = por %p160, %p161
    %p164 = scmp.ne.s32.totalorder %s149, %s163
    %p165 = scmp.eq.s32.totalorder %s18, 0
    %p166 = por %p164, %p165
    %s167 = smul.u32 %s20, %s19
    %s168 = smul.u32 %s27, %s31
    %s169 = ssub.s32 %s167, %s168
    %p170 = scmp.eq.s32.totalorder %s169, 0
    %s172 = sadd.s32 %s171, 1
    %s173 = scalar_select %p170, %s171, %s172
    %p176 = pneg %p170
    %p177 = scmp.eq.s32.totalorder %s12, 1
    %p178 = por %p176, %p177
    %p179 = scmp.ne.s32.totalorder %s171, %s174
    %p180 = scmp.eq.s32.totalorder %s12, 0
    %p181 = por %p179, %p180
    %p182 = scmp.ne.s32.totalorder %s171, %s174
    %p183 = scmp.eq.s32.totalorder %s17, 1
    %p184 = por %p182, %p183
    %p185 = scmp.ne.s32.totalorder %s174, %s175
    %p186 = scmp.eq.s32.totalorder %s17, 0
    %p187 = por %p185, %p186
    %p188 = scmp.ne.s32.totalorder %s174, %s175
    %p189 = scmp.eq.s32.totalorder %s18, 1
    %p190 = por %p188, %p189
    %p192 = scmp.ne.s32.totalorder %s175, %s191
    %p193 = scmp.eq.s32.totalorder %s18, 0
    %p194 = por %p192, %p193
    %p195 = scmp.le.s32.totalorder 1, %s12
    %p196 = scmp.lt.s32.totalorder %s12, 3
    %p197 = pnand %p195, %p196
    %p198 = pneg %p197
    // Predicated region
    $region9: #{tpu_custom_call.1} parent=5 // pred_check
      _
    $region10: #{tpu_custom_call.1} parent=5 // pred_check_branch
      %200 = sbr.rel (%p197) target = $region12
    $region11: #{tpu_custom_call.1} parent=5 // pred_region
      %s201 = ssub.s32 %s12, 1
      // Predicated region
      $region13: #{tpu_custom_call.1} parent=11 // pred_check
        %p202 = pneg %p75
      $region14: #{tpu_custom_call.1} parent=11 // pred_check_branch
        %204 = sbr.rel (%p202) target = $region16
      $region15: #{tpu_custom_call.1} parent=11 // pred_region
        _
      $region16: #{tpu_custom_call.1} parent=11 // pred_fallthru
        _
      // Predicated region
      $region17: #{tpu_custom_call.1} parent=11 // pred_check
        %p205 = pneg %p96
      $region18: #{tpu_custom_call.1} parent=11 // pred_check_branch
        %207 = sbr.rel (%p205) target = $region20
      $region19: #{tpu_custom_call.1} parent=11 // pred_region
        _
      $region20: #{tpu_custom_call.1} parent=11 // pred_fallthru
        _
      // Predicated region
      $region21: #{tpu_custom_call.1} parent=11 // pred_check
        %p208 = pneg %p117
      $region22: #{tpu_custom_call.1} parent=11 // pred_check_branch
        %210 = sbr.rel (%p208) target = $region24
      $region23: #{tpu_custom_call.1} parent=11 // pred_region
        _
      $region24: #{tpu_custom_call.1} parent=11 // pred_fallthru
        _
      // Predicated region
      $region25: #{tpu_custom_call.1} parent=11 // pred_check
        %p211 = pneg %p138
      $region26: #{tpu_custom_call.1} parent=11 // pred_check_branch
        %213 = sbr.rel (%p211) target = $region28
      $region27: #{tpu_custom_call.1} parent=11 // pred_region
        _
      $region28: #{tpu_custom_call.1} parent=11 // pred_fallthru
        _
      // Predicated region
      $region29: #{tpu_custom_call.1} parent=11 // pred_check
        %p214 = pneg %p159
      $region30: #{tpu_custom_call.1} parent=11 // pred_check_branch
        %216 = sbr.rel (%p214) target = $region32
      $region31: #{tpu_custom_call.1} parent=11 // pred_region
        _
      $region32: #{tpu_custom_call.1} parent=11 // pred_fallthru
        _
    $region12: #{tpu_custom_call.1} parent=5 // pred_fallthru
      _
    %p217 = scmp.lt.s32.totalorder %s12, 2
    // Predicated region
    $region33: #{tpu_custom_call.1} parent=5 // pred_check
      %p218 = pneg %p217
    $region34: #{tpu_custom_call.1} parent=5 // pred_check_branch
      %220 = sbr.rel (%p218) target = $region36
    $region35: #{tpu_custom_call.1} parent=5 // pred_region
      // Predicated region
      $region37: #{tpu_custom_call.1} parent=35 // pred_check
        %p221 = pneg %p48
      $region38: #{tpu_custom_call.1} parent=35 // pred_check_branch
        %223 = sbr.rel (%p221) target = $region40
      $region39: #{tpu_custom_call.1} parent=35 // pred_region
        %s224 = ssub.s32 1, %s19
        %s225 = smul.u32 %s20, %s224
        %s226 = smul.u32 6, %s225
        %p227 = scmp.lt.s32.totalorder %s226, 5
        %s228 = scalar_select %p227, %s226, 5
        %s229 = smul.addr %s228, 4
        %s230 = scalar_lea.vmem %s0, %s229
        %s231 = ssub.s32 1, %s19
        %s232 = smul.u32 %s20, %s231
        %s233 = smul.u32 6, %s232
      $region40: #{tpu_custom_call.1} parent=35 // pred_fallthru
        _
    $region36: #{tpu_custom_call.1} parent=5 // pred_fallthru
      _
    %p234 = scmp.le.s32.totalorder 1, %s12
    %p235 = scmp.lt.s32.totalorder %s12, 3
    %p236 = pnand %p234, %p235
    %p237 = pneg %p236
    // Predicated region
    $region41: #{tpu_custom_call.1} parent=5 // pred_check
      _
    $region42: #{tpu_custom_call.1} parent=5 // pred_check_branch
      %239 = sbr.rel (%p236) target = $region44
    $region43: #{tpu_custom_call.1} parent=5 // pred_region
      %s240 = ssub.s32 %s12, 1
      %s241 = ssub.s32 1, %s21
      %s242 = smul.u32 %s22, %s241
      %s243 = smul.u32 6, %s242
      %p244 = scmp.lt.s32.totalorder %s243, 5
      %s245 = scalar_select %p244, %s243, 5
      %s246 = smul.addr %s245, 4
      %s247 = scalar_lea.vmem %s0, %s246
      %p248 = pneg %p54
      %p249 = pneg %p51
      %p250 = pneg %p75
      %p251 = pneg %p72
      %p252 = pneg %p96
      %p253 = pneg %p93
      %p254 = pneg %p117
      %p255 = pneg %p114
      %p256 = pneg %p138
      %p257 = pneg %p135
      %p258 = pneg %p159
      %p259 = pneg %p156
      %p260 = pneg %p187
      %p261 = pneg %p184
      %s262 = smul.u32 %s22, %s21
      %s263 = smul.u32 6, %s262
      %p264 = scmp.lt.s32.totalorder %s263, 5
      %s265 = scalar_select %p264, %s263, 5
      %s266 = smul.addr %s265, 8
      %s267 = scalar_lea.vmem %s6, %s266
      %s268 = ssub.s32 1, %s21
      %s269 = smul.u32 %s22, %s268
      %s270 = smul.u32 6, %s269
      %p271 = scmp.lt.s32.totalorder %s270, 5
      %s272 = scalar_select %p271, %s270, 5
      %s273 = smul.addr %s272, 4
      %s274 = scalar_lea.vmem %s0, %s273
      %s275 = ssub.s32 1, %s21
      %s276 = smul.u32 %s22, %s275
      %s277 = smul.u32 6, %s276
      %s278 = smul.u32 %s22, %s21
      %s279 = smul.u32 6, %s278
      %p280 = scmp.lt.s32.totalorder %s279, 5
      %s281 = scalar_select %p280, %s279, 5
      %s282 = smul.addr %s281, 8
      %s283 = scalar_lea.vmem %s6, %s282
      %s284 = smul.u32 %s22, %s21
      %s285 = smul.u32 6, %s284
      %p287 = scmp.eq.s32.totalorder %s21, 0
      // Predicated region
      $region45: #{tpu_custom_call.1} parent=43 // pred_check
        %p288 = pneg %p287
      $region46: #{tpu_custom_call.1} parent=43 // pred_check_branch
        %290 = sbr.rel (%p288) target = $region48
      $region47: #{tpu_custom_call.1} parent=43 // pred_region
        %p291 = scmp.eq.s32.totalorder %s22, 0
        // Predicated region
        $region49: #{tpu_custom_call.1} parent=47 // pred_check
          %p292 = pneg %p291
        $region50: #{tpu_custom_call.1} parent=47 // pred_check_branch
          %294 = sbr.rel (%p292) target = $region52
        $region51: #{tpu_custom_call.1} parent=47 // pred_region
          %295 = vst [vmem:[#allocation2] sm:$0x1] 0.0
          %296 = vst [vmem:[#allocation3] sm:$0x1] 0.0
        $region52: #{tpu_custom_call.1} parent=47 // pred_fallthru
          _
        %v297 = vld [vmem:[%s274] sm:$0xf]
        %v298 = vld [vmem:[%s274 + $0x4] sm:$0xf]
        %v299 = vld [vmem:[%s274 + $0x8] sm:$0xf]
        %v300 = vld [vmem:[%s274 + $0xc] sm:$0xf]
        %v301 = vld [vmem:[%s274 + $0x10] sm:$0xf]
        %v302 = vld [vmem:[%s274 + $0x14] sm:$0xf]
        %v303 = vld [vmem:[%s1] sm:$0xf]
        %v304 = vld [vmem:[%s1 + $0x4] sm:$0xf]
        %v305 = vld [vmem:[%s1 + $0x8] sm:$0xf]
        %v306 = vld [vmem:[%s1 + $0xc] sm:$0xf]
        %v313 = vunpack.c.l.b16 %v297
        %v314 = vunpack.c.l.b16 %v298
        %v315 = vunpack.c.l.b16 %v299
        %v316 = vunpack.c.l.b16 %v300
        %v317 = vunpack.c.l.b16 %v301
        %v318 = vunpack.c.l.b16 %v302
        %v319 = vpack.c.b16 %v314, %v313
        %v320 = vpack.c.b16 %v316, %v315
        %v321 = vpack.c.b16 %v318, %v317
        %v326 = vunpack.c.l.b16 %v303
        %v327 = vunpack.c.l.b16 %v304
        %v328 = vunpack.c.l.b16 %v305
        %v329 = vunpack.c.l.b16 %v306
        %v330 = vpack.c.b16 %v327, %v326
        %v331 = vpack.c.b16 %v329, %v328
        %vm334 = vcmask 261120
        %v336 = vsel %vm334, %v319, 0
        %v339 = vsel %vm334, %v320, 0
        %v342 = vsel %vm334, %v321, 0
        %344 = vmatpush.bf16.msra.mxu0 0
        %345 = vmatpush.bf16.msra.mxu0 0
        %346 = vmatpush.bf16.msra.mxu0 0
        %347 = vmatpush.bf16.msra.mxu0 0
        %348 = vmatpush.bf16.msra.mxu0 0
        %349 = vmatpush.bf16.msra.mxu0 0
        %350 = vmatpush.bf16.msra.mxu0 %v331
        %351 = vmatpush.bf16.msra.mxu0 %v330
        %352 = vmatmul.bf16.gmra.mxu0 %v336
        %v353 = vpop.f32.mrf.mxu0
        %v354 = vadd.f32 0.0, %v353
        %v355 = vpop.f32.mrf.mxu0
        %v356 = vadd.f32 0.0, %v355
        %357 = vmatmul.bf16.gmra.mxu0 %v339
        %v358 = vpop.f32.mrf.mxu0
        %v359 = vadd.f32 0.0, %v358
        %v360 = vpop.f32.mrf.mxu0
        %v361 = vadd.f32 0.0, %v360
        %362 = vmatmul.bf16.gmra.mxu0 %v342
        %v363 = vpop.f32.mrf.mxu0
        %v364 = vadd.f32 0.0, %v363
        %v365 = vpop.f32.mrf.mxu0
        %v366 = vadd.f32 0.0, %v365
        %367 = vdwg.mxu0
        %v368 = vpack.c.bf16 %v354, %v354
        %v369 = vpack.c.bf16 %v356, %v356
        %v370 = vpack.c.bf16 %v359, %v359
        %v371 = vpack.c.bf16 %v361, %v361
        %v372 = vpack.c.bf16 %v364, %v364
        %v373 = vpack.c.bf16 %v366, %v366
        %s374 = smul.u32 %s22, 6
        %s375 = smul.addr %s374, 4
        %s376 = scalar_lea.vmem [#allocation6], %s375
        %377 = vst [vmem:[%s376] sm:$0xf] %v368
        %378 = vst [vmem:[%s376 + $0x4] sm:$0xf] %v369
        %379 = vst [vmem:[%s376 + $0x8] sm:$0xf] %v370
        %380 = vst [vmem:[%s376 + $0xc] sm:$0xf] %v371
        %381 = vst [vmem:[%s376 + $0x10] sm:$0xf] %v372
        %382 = vst [vmem:[%s376 + $0x14] sm:$0xf] %v373
        %v383 = vld [vmem:[#allocation2] sm:$0x1]
        %v384 = vadd.f32 %v354, %v356
        %v385 = vadd.f32 %v384, %v359
        %v386 = vadd.f32 %v385, %v361
        %v387 = vadd.f32 %v386, %v364
        %v388 = vadd.f32 %v387, %v366
        %v389 = vrot.slane %v388, 4
        %v390 = vadd.f32 %v388, %v389
        %v391 = vrot.slane %v390, 2
        %v392 = vadd.f32 %v390, %v391
        %v393 = vrot.slane %v392, 1
        %v394 = vadd.f32 %v392, %v393
        %v395 = vadd.f32 %v383, %v394
        %396 = vst [vmem:[#allocation2] sm:$0x1] %v395
        %v397 = vld [vmem:[#allocation3] sm:$0x1]
        %v398 = vmul.f32 %v354, %v354
        %v399 = vmul.f32 %v356, %v356
        %v400 = vmul.f32 %v359, %v359
        %v401 = vmul.f32 %v361, %v361
        %v402 = vmul.f32 %v364, %v364
        %v403 = vmul.f32 %v366, %v366
        %v404 = vadd.f32 %v398, %v399
        %v405 = vadd.f32 %v404, %v400
        %v406 = vadd.f32 %v405, %v401
        %v407 = vadd.f32 %v406, %v402
        %v408 = vadd.f32 %v407, %v403
        %v409 = vrot.slane %v408, 4
        %v410 = vadd.f32 %v408, %v409
        %v411 = vrot.slane %v410, 2
        %v412 = vadd.f32 %v410, %v411
        %v413 = vrot.slane %v412, 1
        %v414 = vadd.f32 %v412, %v413
        %v415 = vadd.f32 %v397, %v414
        %416 = vst [vmem:[#allocation3] sm:$0x1] %v415
        // Predicated region
        $region53: #{tpu_custom_call.1} parent=47 // pred_check
          %p417 = pneg %p291
        $region54: #{tpu_custom_call.1} parent=47 // pred_check_branch
          %419 = sbr.rel (%p417) target = $region56
        $region55: #{tpu_custom_call.1} parent=47 // pred_region
          %v420 = vld [vmem:[#allocation2] sm:$0x1]
          %v421 = vmul.f32 %v420, 0.025
          %v422 = vld [vmem:[#allocation3] sm:$0x1]
          %v423 = vmul.f32 %v422, 0.025
          %v424 = vmul.f32 %v421, %v421
          %v425 = vsub.f32 %v423, %v424
          %v426 = vmax.f32 %v425, 0.0
          %v427 = vld [vmem:[%s2] sm:$0x1]
          %v428 = vadd.f32 %v426, 1e-05
          %v429 = vrsqrt.pop %v428
          %v430 = vmul.f32 %v429, %v428
          %v431 = vmul.f32 %v430, %v429
          %v432 = vmul.f32 0.5, %v431
          %v433 = vsub.f32 1.5, %v432
          %v434 = vmul.f32 %v429, %v433
          %vm435 = vweird.f32 %v428
          %vm436 = vweird.f32 %v429
          %vm437 = vmor %vm435, %vm436
          %v438 = vsel %vm437, %v429, %v434
          %v439 = vmul.f32 %v427, %v438
          %440 = vst [vmem:[#allocation4] sm:$0x1] %v439
          %v441 = vld [vmem:[%s3] sm:$0x1]
          %v442 = vmul.f32 %v421, %v439
          %v443 = vsub.f32 %v441, %v442
          %444 = vst [vmem:[#allocation5] sm:$0x1] %v443
        $region56: #{tpu_custom_call.1} parent=47 // pred_fallthru
          _
      $region48: #{tpu_custom_call.1} parent=43 // pred_fallthru
        _
      %p445 = scmp.eq.s32.totalorder %s21, 1
      // Predicated region
      $region57: #{tpu_custom_call.1} parent=43 // pred_check
        %p446 = pneg %p445
      $region58: #{tpu_custom_call.1} parent=43 // pred_check_branch
        %448 = sbr.rel (%p446) target = $region60
      $region59: #{tpu_custom_call.1} parent=43 // pred_region
        %s449 = smul.u32 %s22, 6
        %s450 = smul.addr %s449, 4
        %s451 = scalar_lea.vmem [#allocation6], %s450
        %v452 = vld [vmem:[%s451] sm:$0xf]
        %v453 = vld [vmem:[%s451 + $0x4] sm:$0xf]
        %v454 = vld [vmem:[%s451 + $0x8] sm:$0xf]
        %v455 = vld [vmem:[%s451 + $0xc] sm:$0xf]
        %v456 = vld [vmem:[%s451 + $0x10] sm:$0xf]
        %v457 = vld [vmem:[%s451 + $0x14] sm:$0xf]
        %v458 = vunpack.c.l.bf16 %v452
        %v459 = vunpack.c.l.bf16 %v453
        %v460 = vunpack.c.l.bf16 %v454
        %v461 = vunpack.c.l.bf16 %v455
        %v462 = vunpack.c.l.bf16 %v456
        %v463 = vunpack.c.l.bf16 %v457
        %v464 = vld [vmem:[#allocation4] sm:$0x1]
        %v466 = vperm.slane %v464, 0
        %v468 = vmul.f32 %v458, %v466
        %v469 = vmul.f32 %v459, %v466
        %v470 = vmul.f32 %v460, %v466
        %v471 = vmul.f32 %v461, %v466
        %v472 = vmul.f32 %v462, %v466
        %v473 = vmul.f32 %v463, %v466
        %v474 = vld [vmem:[#allocation5] sm:$0x1]
        %v476 = vperm.slane %v474, 0
        %v478 = vadd.f32 %v468, %v476
        %v479 = vadd.f32 %v469, %v476
        %v480 = vadd.f32 %v470, %v476
        %v481 = vadd.f32 %v471, %v476
        %v482 = vadd.f32 %v472, %v476
        %v483 = vadd.f32 %v473, %v476
        %v484 = vtanh.pop %v478
        %v485 = vtanh.pop %v479
        %v486 = vtanh.pop %v480
        %v487 = vtanh.pop %v481
        %v488 = vtanh.pop %v482
        %v489 = vtanh.pop %v483
        %v490 = vpack.c.bf16 %v485, %v484
        %v491 = vpack.c.bf16 %v487, %v486
        %v492 = vpack.c.bf16 %v489, %v488
        %v493 = vld [vmem:[%s4] sm:$0xf]
        %v494 = vld [vmem:[%s4 + $0x4] sm:$0xf]
        %v495 = vld [vmem:[%s4 + $0x8] sm:$0xf]
        %v496 = vld [vmem:[%s4 + $0xc] sm:$0xf]
        %v497 = vld [vmem:[%s4 + $0x10] sm:$0xf]
        %v498 = vld [vmem:[%s4 + $0x14] sm:$0xf]
        %v499 = vld [vmem:[%s4 + $0x18] sm:$0xf]
        %v500 = vld [vmem:[%s4 + $0x1c] sm:$0xf]
        %v501 = vld [vmem:[%s4 + $0x20] sm:$0xf]
        %v502 = vld [vmem:[%s4 + $0x24] sm:$0xf]
        %v503 = vld [vmem:[%s4 + $0x28] sm:$0xf]
        %v504 = vld [vmem:[%s4 + $0x2c] sm:$0xf]
        %v505 = vld [vmem:[%s4 + $0x30] sm:$0xf]
        %v506 = vld [vmem:[%s4 + $0x34] sm:$0xf]
        %v507 = vld [vmem:[%s4 + $0x38] sm:$0xf]
        %v508 = vld [vmem:[%s4 + $0x3c] sm:$0xf]
        %v509 = vld [vmem:[%s5] sm:$0x1]
        %v511 = vperm.slane %v509, 0
        %v529 = vunpack.c.l.b16 %v493
        %v530 = vunpack.c.l.b16 %v494
        %v531 = vunpack.c.l.b16 %v495
        %v532 = vunpack.c.l.b16 %v496
        %v533 = vunpack.c.l.b16 %v497
        %v534 = vunpack.c.l.b16 %v498
        %v535 = vunpack.c.l.b16 %v499
        %v536 = vunpack.c.l.b16 %v500
        %v537 = vunpack.c.l.b16 %v501
        %v538 = vunpack.c.l.b16 %v502
        %v539 = vunpack.c.l.b16 %v503
        %v540 = vunpack.c.l.b16 %v504
        %v541 = vunpack.c.l.b16 %v505
        %v542 = vunpack.c.l.b16 %v506
        %v543 = vunpack.c.l.b16 %v507
        %v544 = vunpack.c.l.b16 %v508
        %v545 = vpack.c.b16 %v530, %v529
        %v546 = vpack.c.b16 %v532, %v531
        %v547 = vpack.c.b16 %v534, %v533
        %v548 = vpack.c.b16 %v536, %v535
        %v549 = vpack.c.b16 %v538, %v537
        %v550 = vpack.c.b16 %v540, %v539
        %v551 = vpack.c.b16 %v542, %v541
        %v552 = vpack.c.b16 %v544, %v543
        %561 = vmatpush.bf16.msra.mxu0 %v552
        %562 = vmatpush.bf16.msra.mxu0 %v551
        %563 = vmatpush.bf16.msra.mxu0 %v550
        %564 = vmatpush.bf16.msra.mxu0 %v549
        %565 = vmatpush.bf16.msra.mxu0 %v548
        %566 = vmatpush.bf16.msra.mxu0 %v547
        %567 = vmatpush.bf16.msra.mxu0 %v546
        %568 = vmatpush.bf16.msra.mxu0 %v545
        %569 = vmatmul.bf16.gmra.mxu0 %v490
        %v570 = vpop.f32.mrf.mxu0
        %v571 = vadd.f32 %v511, %v570
        %v572 = vpop.f32.mrf.mxu0
        %v573 = vadd.f32 %v511, %v572
        %574 = vmatmul.bf16.gmra.mxu0 %v491
        %v575 = vpop.f32.mrf.mxu0
        %v576 = vadd.f32 %v511, %v575
        %v577 = vpop.f32.mrf.mxu0
        %v578 = vadd.f32 %v511, %v577
        %579 = vmatmul.bf16.gmra.mxu0 %v492
        %v580 = vpop.f32.mrf.mxu0
        %v581 = vadd.f32 %v511, %v580
        %v582 = vpop.f32.mrf.mxu0
        %v583 = vadd.f32 %v511, %v582
        %584 = vdwg.mxu0
        %vm585 = vcmask 130048
        %586 = vst.msk [vmem:[%s283] sm:$0xff] %vm585, %v571
        %587 = vst.msk [vmem:[%s283 + $0x8] sm:$0xff] %vm585, %v573
        %588 = vst.msk [vmem:[%s283 + $0x10] sm:$0xff] %vm585, %v576
        %589 = vst.msk [vmem:[%s283 + $0x18] sm:$0xff] %vm585, %v578
        %590 = vst.msk [vmem:[%s283 + $0x20] sm:$0xff] %vm585, %v581
        %591 = vst.msk [vmem:[%s283 + $0x28] sm:$0xff] %vm585, %v583
      $region60: #{tpu_custom_call.1} parent=43 // pred_fallthru
        _
      %s592 = smul.u32 %s22, %s21
      %s593 = smul.u32 6, %s592
      %p594 = scmp.lt.s32.totalorder %s593, 5
      %s595 = scalar_select %p594, %s593, 5
      %s596 = smul.addr %s595, 8
      %s597 = scalar_lea.vmem %s6, %s596
      // Predicated region
      $region61: #{tpu_custom_call.1} parent=43 // pred_check
        %p598 = pneg %p184
      $region62: #{tpu_custom_call.1} parent=43 // pred_check_branch
        %600 = sbr.rel (%p598) target = $region64
      $region63: #{tpu_custom_call.1} parent=43 // pred_region
        %s601 = smul.u32 %s22, %s21
        %s602 = smul.u32 6, %s601
      $region64: #{tpu_custom_call.1} parent=43 // pred_fallthru
        _
    $region44: #{tpu_custom_call.1} parent=5 // pred_fallthru
      _
    %p603 = scmp.le.s32.totalorder 2, %s12
    // Predicated region
    $region65: #{tpu_custom_call.1} parent=5 // pred_check
      %p604 = pneg %p603
    $region66: #{tpu_custom_call.1} parent=5 // pred_check_branch
      %606 = sbr.rel (%p604) target = $region68
    $region67: #{tpu_custom_call.1} parent=5 // pred_region
      %s607 = ssub.s32 %s12, 2
      // Predicated region
      $region69: #{tpu_custom_call.1} parent=67 // pred_check
        %p608 = pneg %p190
      $region70: #{tpu_custom_call.1} parent=67 // pred_check_branch
        %610 = sbr.rel (%p608) target = $region72
      $region71: #{tpu_custom_call.1} parent=67 // pred_region
        %s611 = smul.u32 %s24, %s23
        %s612 = smul.u32 6, %s611
        %p613 = scmp.lt.s32.totalorder %s612, 5
        %s614 = scalar_select %p613, %s612, 5
        %s615 = smul.addr %s614, 8
        %s616 = scalar_lea.vmem %s6, %s615
      $region72: #{tpu_custom_call.1} parent=67 // pred_fallthru
        _
    $region68: #{tpu_custom_call.1} parent=5 // pred_fallthru
      _
  $region6: #{tpu_custom_call.1} parent=0 // loop_footer
    %s16 = sadd.s32 1, %s12
  $region7: #{tpu_custom_call.1} parent=0 // loop_footer_branch
    %11 = sbr.rel target = $region3
  $region8: #{tpu_custom_call.1} parent=0 // loop_exit
    _

</llo_original>
